<compile_context>
chip_gen: v7x
topology: tpu7x:2x2x1
jax: 0.10.0
libtpu: 0.0.40
codegen_flags: <defaults>
</compile_context>

<pallas_src>
import jax
import jax.numpy as jnp
from jax.experimental import pallas as pl
from jax.experimental.pallas import tpu as pltpu


def _linear_hardswish_kernel(x_ref, wb_ref, o_ref):
    # Whole arrays live in VMEM; shapes are tiny so each ref is the full array.
    x = x_ref[...]                       # (M, K) f32
    K = x_ref.shape[1]

    # wb packs weight (K, N) and bias (1, N) along the sublane axis.
    w = wb_ref[:K, :]                    # (K, N) f32  (static slice, free view)
    b = wb_ref[K:K + 1, :]               # (1, N) f32

    # Linear: one MXU matmul (accumulates in f32) + broadcast bias add.
    v1 = jnp.dot(x, w, preferred_element_type=jnp.float32) + b   # (M, N)

    # Hardswish-style gate, matching the PyTorch graph:
    #   v2 = v1 * clamp(v1 + 3, 0, 6) ; v3 = v2 / 6
    v2 = v1 * jnp.clip(v1 + 3.0, 0.0, 6.0)
    o_ref[...] = (v2 / 6.0).astype(o_ref.dtype)


def pack_params(w, b):
    """Pack weight (K, N) and bias (N,) into a single (K+1, N) operand."""
    K, N = w.shape
    return jnp.concatenate([w, b.reshape(1, N)], axis=0)


@jax.jit
def linear_hardswish(x, wb):
    """x: (M, K) f32, wb: (K+1, N) f32 (weight rows + bias row) -> (M, N) f32."""
    M, K = x.shape
    N = wb.shape[1]

    # Gridless, single-invocation kernel: operands are pinned whole in VMEM
    # (< 8 KiB padded), so we skip grid loops and double-buffering entirely.
    return pl.pallas_call(
        _linear_hardswish_kernel,
        out_shape=jax.ShapeDtypeStruct((M, N), x.dtype),
        in_specs=[
            pl.BlockSpec(memory_space=pltpu.MemorySpace.VMEM),
            pl.BlockSpec(memory_space=pltpu.MemorySpace.VMEM),
        ],
        out_specs=pl.BlockSpec(memory_space=pltpu.MemorySpace.VMEM),
    )(x, wb)


def reference(x, w, b):
    v1 = x @ w + b
    v2 = v1 * jnp.clip(v1 + 3.0, 0.0, 6.0)
    return v2 / 6.0


if __name__ == "__main__":
    key = jax.random.PRNGKey(0)
    kx, kw, kb = jax.random.split(key, 3)

    # Input matching the module: x1 = torch.randn(6, 5)
    x = jax.random.normal(kx, (6, 5), dtype=jnp.float32)

    # Deterministic Linear(5, 8) parameters (torch-style uniform init,
    # bound = 1/sqrt(in_features)), stored as (in_features, out_features)
    # so the kernel computes x @ w + b.
    bound = 1.0 / jnp.sqrt(5.0)
    w = jax.random.uniform(kw, (5, 8), dtype=jnp.float32, minval=-bound, maxval=bound)
    b = jax.random.uniform(kb, (8,), dtype=jnp.float32, minval=-bound, maxval=bound)

    wb = pack_params(w, b)   # packed once, outside the jitted wrapper

    out = jax.block_until_ready(linear_hardswish(x, wb))

    ref = reference(x, w, b)
    assert out.shape == (6, 8)
    assert jnp.allclose(out, ref, atol=1e-5, rtol=1e-5)

    print("KERNEL_OK")
</pallas_src>

<mosaic_0001>
module attributes {stable_mosaic.version = 11 : i64} {
  func.func @_linear_hardswish_kernel(%arg0: memref<6x5xf32, #tpu.memory_space<vmem>>, %arg1: memref<6x8xf32, #tpu.memory_space<vmem>>, %arg2: memref<6x8xf32, #tpu.memory_space<vmem>>) attributes {dimension_semantics = [], scalar_prefetch = 0 : i64, scratch_operands = 0 : i64, tpu.core_type = #tpu.core_type<tc>} {
    %c0 = arith.constant 0 : index
    %c0_0 = arith.constant 0 : index
    %0 = vector.load %arg0[%c0, %c0_0] : memref<6x5xf32, #tpu.memory_space<vmem>>, vector<6x5xf32>
    %c0_1 = arith.constant 0 : index
    %c0_2 = arith.constant 0 : index
    %1 = vector.load %arg1[%c0_1, %c0_2] : memref<6x8xf32, #tpu.memory_space<vmem>>, vector<5x8xf32>
    %c5 = arith.constant 5 : index
    %c0_3 = arith.constant 0 : index
    %2 = vector.load %arg1[%c5, %c0_3] : memref<6x8xf32, #tpu.memory_space<vmem>>, vector<1x8xf32>
    %cst = arith.constant dense<0.000000e+00> : vector<6x8xf32>
    %3 = tpu.matmul %0, %1, %cst {dimension_numbers = #tpu.dot_dimension_numbers<[1], [0], [0], [1], [0, 0, 1, 1], [], []>} : vector<6x5xf32>, vector<5x8xf32>, vector<6x8xf32> -> vector<6x8xf32>
    %4 = vector.broadcast %2 : vector<1x8xf32> to vector<6x8xf32>
    %5 = arith.addf %3, %4 : vector<6x8xf32>
    %cst_4 = arith.constant 3.000000e+00 : f32
    %6 = vector.broadcast %cst_4 : f32 to vector<6x8xf32>
    %7 = arith.addf %5, %6 : vector<6x8xf32>
    %cst_5 = arith.constant 0.000000e+00 : f32
    %cst_6 = arith.constant 6.000000e+00 : f32
    %8 = vector.broadcast %cst_5 : f32 to vector<6x8xf32>
    %9 = arith.maximumf %8, %7 : vector<6x8xf32>
    %10 = vector.broadcast %cst_6 : f32 to vector<6x8xf32>
    %11 = arith.minimumf %10, %9 : vector<6x8xf32>
    %12 = arith.mulf %5, %11 : vector<6x8xf32>
    %cst_7 = arith.constant 6.000000e+00 : f32
    %13 = vector.broadcast %cst_7 : f32 to vector<6x8xf32>
    %14 = arith.divf %12, %13 : vector<6x8xf32>
    %c0_8 = arith.constant 0 : index
    %c0_9 = arith.constant 0 : index
    %15 = vector.load %arg2[%c0_8, %c0_9] : memref<6x8xf32, #tpu.memory_space<vmem>>, vector<6x8xf32>
    tpu.vector_store %arg2[%c0_8, %c0_9], %14 {strides = array<i32>} : memref<6x8xf32, #tpu.memory_space<vmem>>, vector<6x8xf32>,
    return
  }
}

</mosaic_0001>

<llo_original>
// kernel: linear_hardswish.1
$region0: #{linear_hardswish.1}
  #allocation0 [shape = 'u32[]', space=smem, size = 0x4, offset = 0x4, fixed_abs, tag = 'smem constant byte address 0x4 - core index']
  #allocation1 [shape = 'u32[144,128]{1,0:T(1,128)}', space=vmem, size = 0x12000, scoped, tag = 'internal scratch']
  %s0 = inlined_call_operand.hbm [shape: f32[6,5], index: 0, kind: input, shape index: {}]
  %s1 = inlined_call_operand.hbm [shape: f32[6,8], index: 1, kind: input, shape index: {}]
  %s2 = inlined_call_operand.hbm [shape: f32[6,8], index: 2, kind: output, shape index: {}]
  %s3 = sld [smem:[#allocation0]]
  $region26: #{linear_hardswish.1} parent=0
    _
  %s5 = ssub.s32 1, %s3
  %s6 = scalar_select 0, %s5, %s3
  $region1: #{linear_hardswish.1} parent=0
    #allocation2 [shape = 'u8[4096]{0}', space=vmem, size = 0x1000, scoped, tag = 'input window, operand 0, single buffered']
    #allocation3 [shape = 's32[1]{0}', space=sflag, size = 0x4, scoped, tag = 'scoped memory for linear_hardswish.1']
    #allocation4 [shape = 's32[1]{0}', space=sflag, size = 0x4, scoped, tag = 'scoped memory for linear_hardswish.1']
    #allocation5 [shape = 'u8[4096]{0}', space=vmem, size = 0x1000, scoped, tag = 'input window, operand 1, single buffered']
    #allocation6 [shape = 's32[1]{0}', space=sflag, size = 0x4, scoped, tag = 'scoped memory for linear_hardswish.1']
    #allocation7 [shape = 'u8[4096]{0}', space=vmem, size = 0x1000, scoped, tag = 'output window, operand 0, single buffered']
    %7 = vsyncpa [#allocation3], 0
    %8 = vsyncpa [#allocation6], 0
    %9 = vsyncpa [#allocation4], 0
    // Predicated region
    $region2: #{linear_hardswish.1} parent=1 // pred_check
      _
    $region3: #{linear_hardswish.1} parent=1 // pred_check_branch
      %11 = sbr.rel (0) target = $region5
    $region4: #{linear_hardswish.1} parent=1 // pred_region
      %s13 = ssub.s32 128, 128
      %14 = vsyncadd [#allocation3], %s13
      %s16 = sshll.u32 [#allocation2], 4
      %s17 = int_to_ptr.vmem [resolvable:$true] %s16
      %19 = dma.hbm_to_vmem [thread:$0]  %s0, 128, %s17, [#allocation3]
    $region5: #{linear_hardswish.1} parent=1 // pred_fallthru
      _
    // Predicated region
    $region6: #{linear_hardswish.1} parent=1 // pred_check
      _
    $region7: #{linear_hardswish.1} parent=1 // pred_check_branch
      %21 = sbr.rel (0) target = $region9
    $region8: #{linear_hardswish.1} parent=1 // pred_region
      %s23 = ssub.s32 128, 128
      %24 = vsyncadd [#allocation6], %s23
      %s26 = sshll.u32 [#allocation5], 4
      %s27 = int_to_ptr.vmem [resolvable:$true] %s26
      %29 = dma.hbm_to_vmem [thread:$0]  %s1, 128, %s27, [#allocation6]
    $region9: #{linear_hardswish.1} parent=1 // pred_fallthru
      _
    // Predicated region
    $region10: #{linear_hardswish.1} parent=1 // pred_check
      _
    $region11: #{linear_hardswish.1} parent=1 // pred_check_branch
      %31 = sbr.rel (0) target = $region13
    $region12: #{linear_hardswish.1} parent=1 // pred_region
      %32 = dma.done [#allocation3], 128
    $region13: #{linear_hardswish.1} parent=1 // pred_fallthru
      _
    // Predicated region
    $region14: #{linear_hardswish.1} parent=1 // pred_check
      _
    $region15: #{linear_hardswish.1} parent=1 // pred_check_branch
      %34 = sbr.rel (0) target = $region17
    $region16: #{linear_hardswish.1} parent=1 // pred_region
      %35 = dma.done [#allocation6], 128
    $region17: #{linear_hardswish.1} parent=1 // pred_fallthru
      _
    %v36 = vld [vmem:[#allocation2] sm:$0x3f]
    %v37 = vld [vmem:[#allocation5] sm:$0x1f]
    %v38 = vld [vmem:[#allocation5 + $0x5] sm:$0x1]
    %v39 = vlaneseq
    %v40 = vshrl.u32 %v39, 7
    %v41 = vsub.s32 0, %v40
    %v42 = vrot.slane %v38, %v41
    %vm43 = vcmask 39936
    %v45 = vsel %vm43, %v36, 0
    %vm47 = vcmask 1044480
    %v49 = vsel %vm47, %v37, 0
    %51 = vmatprep.subr.mxu0 0.0
    %52 = vmatpush1.msra.mxu0 %v49
    %53 = vmatprep.subr.mxu0 0.0
    %54 = vmatpush1.msra.mxu0 0.0
    %55 = vmatprep.subr.mxu0 0.0
    %56 = vmatpush1.msra.mxu0 0.0
    %57 = vmatprep.subr.mxu0 0.0
    %58 = vmatpush1.msra.mxu0 0.0
    %59 = vmatprep.subr.mxu0 0.0
    %60 = vmatpush1.msra.mxu0 0.0
    %61 = vmatprep.subr.mxu0 0.0
    %62 = vmatpush1.msra.mxu0 0.0
    %63 = vmatprep.subr.mxu0 0.0
    %64 = vmatpush1.msra.mxu0 0.0
    %65 = vmatprep.subr.mxu0 0.0
    %66 = vmatpush1.msra.mxu0 0.0
    %67 = vmatprep.subr.mxu0 0.0
    %68 = vmatpush1.msra.mxu0 0.0
    %69 = vmatprep.subr.mxu0 0.0
    %70 = vmatpush1.msra.mxu0 0.0
    %71 = vmatprep.subr.mxu0 0.0
    %72 = vmatpush1.msra.mxu0 0.0
    %73 = vmatprep.subr.mxu0 0.0
    %74 = vmatpush1.msra.mxu0 0.0
    %75 = vmatprep.subr.mxu0 0.0
    %76 = vmatpush1.msra.mxu0 0.0
    %77 = vmatprep.subr.mxu0 0.0
    %78 = vmatpush1.msra.mxu0 0.0
    %79 = vmatprep.subr.mxu0 0.0
    %80 = vmatpush1.msra.mxu0 0.0
    %81 = vmatprep.subr.mxu0 0.0
    %82 = vmatpush1.msra.mxu0 0.0
    %83 = vmatprep.subr.mxu0 0.0
    %84 = vmatpush1.msra.mxu0 0.0
    %85 = vmatprep.subr.mxu0 0.0
    %86 = vmatpush1.msra.mxu0 0.0
    %87 = vmatprep.subr.mxu0 0.0
    %88 = vmatpush1.msra.mxu0 0.0
    %89 = vmatprep.subr.mxu0 0.0
    %90 = vmatpush1.msra.mxu0 0.0
    %91 = vmatprep.subr.mxu0 0.0
    %92 = vmatpush1.msra.mxu0 0.0
    %93 = vmatprep.subr.mxu0 0.0
    %94 = vmatpush1.msra.mxu0 0.0
    %95 = vmatprep.subr.mxu0 0.0
    %96 = vmatpush1.msra.mxu0 0.0
    %97 = vmatprep.subr.mxu0 0.0
    %98 = vmatpush1.msra.mxu0 0.0
    %99 = vmatprep.subr.mxu0 0.0
    %100 = vmatpush1.msra.mxu0 0.0
    %101 = vmatprep.subr.mxu0 0.0
    %102 = vmatpush1.msra.mxu0 0.0
    %103 = vmatprep.subr.mxu0 0.0
    %104 = vmatpush1.msra.mxu0 0.0
    %105 = vmatprep.subr.mxu0 0.0
    %106 = vmatpush1.msra.mxu0 0.0
    %107 = vmatprep.subr.mxu0 0.0
    %108 = vmatpush1.msra.mxu0 0.0
    %109 = vmatprep.subr.mxu0 0.0
    %110 = vmatpush1.msra.mxu0 0.0
    %111 = vmatprep.subr.mxu0 0.0
    %112 = vmatpush1.msra.mxu0 0.0
    %113 = vmatprep.subr.mxu0 0.0
    %114 = vmatpush1.msra.mxu0 0.0
    %115 = vmatprep.mubr.f32.mxu0 0.0
    %116 = vmatmul.mubr.f32.gmra.mrb[0].mxu0 %v45
    %v117 = vpop.f32.mrb[0].mxu0
    %v118 = vadd.f32 %v42, %v117
    %v119 = vpop.f32.mrb[0].mxu0
    %120 = vdwg.mxu0
    %v121 = vadd.f32 %v118, 3.0
    %v122 = vmax.f32 %v121, 0.0
    %v123 = vmin.f32 %v122, 6.0
    %v124 = vmul.f32 %v118, %v123
    %v125 = vrcp.pop 6.0
    %v126 = vmul.f32 %v124, %v125
    %vm127 = vcmask 62464
    %128 = vst.msk [vmem:[#allocation7] sm:$0x3f] %vm127, %v126
    // Predicated region
    $region18: #{linear_hardswish.1} parent=1 // pred_check
      _
    $region19: #{linear_hardswish.1} parent=1 // pred_check_branch
      %130 = sbr.rel (0) target = $region21
    $region20: #{linear_hardswish.1} parent=1 // pred_region
      %s132 = ssub.s32 128, 128
      %133 = vsyncadd [#allocation4], %s132
      %s135 = sshll.u32 [#allocation7], 4
      %s136 = int_to_ptr.vmem [resolvable:$true] %s135
      %138 = dma.vmem_to_hbm [thread:$0]  %s136, 128, %s2, [#allocation4]
    $region21: #{linear_hardswish.1} parent=1 // pred_fallthru
      _
    // Predicated region
    $region22: #{linear_hardswish.1} parent=1 // pred_check
      _
    $region23: #{linear_hardswish.1} parent=1 // pred_check_branch
      %140 = sbr.rel (0) target = $region25
    $region24: #{linear_hardswish.1} parent=1 // pred_region
      %141 = dma.done [#allocation4], 128
    $region25: #{linear_hardswish.1} parent=1 // pred_fallthru
      _
    %142 = vsyncpa [#allocation3], 1
    %143 = vsyncpa [#allocation6], 1
    %144 = vsyncpa [#allocation4], 1

</llo_original>
